<compile_context>
chip_gen: v5e
topology: v5e:2x2
jax: 0.10.0
libtpu: 0.0.40
codegen_flags: <defaults>
</compile_context>

<pallas_src>
import jax
import jax.numpy as jnp
from jax.experimental import pallas as pl
from jax.experimental.pallas import tpu as pltpu

EPS = 1e-6  # nn.PairwiseDistance default eps (added to the difference elementwise)


def _distance_kernel(x_ref, w_ref, o_ref):
    """x_ref: (TB, 3*D) rows = [x0 | x1 | x2]; w_ref: (D, H); o_ref: (3, TB)."""
    d = w_ref.shape[0]
    x = x_ref[...]
    x0 = x[:, 0 * d:1 * d]
    x1 = x[:, 1 * d:2 * d]
    x2 = x[:, 2 * d:3 * d]

    # Differences in D-space (VPU), then project only two of them on the MXU.
    w = w_ref[...]
    y12 = jnp.dot(x1 - x2, w, preferred_element_type=jnp.float32)  # (x1 - x2) @ W
    y02 = jnp.dot(x0 - x2, w, preferred_element_type=jnp.float32)  # (x0 - x2) @ W
    y01 = y02 - y12                                                # (x0 - x1) @ W (linearity)

    def neg_dist(t):
        t = t + EPS                                   # PairwiseDistance eps semantics
        return -jnp.sqrt(jnp.sum(t * t, axis=-1))     # (TB,)

    # Lane-dense row stores; row order matches the PyTorch hstack: d12, d02, d01.
    o_ref[0, :] = neg_dist(y12).astype(o_ref.dtype)
    o_ref[1, :] = neg_dist(y02).astype(o_ref.dtype)
    o_ref[2, :] = neg_dist(y01).astype(o_ref.dtype)


def _choose_tile(B, D, target_step_bytes):
    """Batch tile: ~target bytes of feature data per grid step, >=2 steps when possible."""
    row_bytes = 3 * D * 4
    tb = max(128, pl.cdiv(target_step_bytes, row_bytes))
    tb = min(tb, max(128, pl.cdiv(B, 2)))   # keep >=2 grid steps for v7x's 2 TensorCores
    tb = pl.cdiv(tb, 128) * 128             # lane-align (output rows are (3, tb))
    if tb >= B:
        tb = B                              # single full-extent block (exempt from (8,128) rule)
    return tb


def _vmem_limit_bytes(tb, D, H):
    x_tile = tb * 3 * D * 4
    w_tile = D * H * 4
    o_tile = 3 * tb * 4
    interm = 8 * tb * max(D, H, 128) * 4    # f32 diffs / projected tiles / slack
    needed = 2 * (x_tile + w_tile + o_tile) + interm + (8 << 20)
    try:
        cap = pltpu.get_tpu_info().vmem_capacity_bytes   # 128 MiB v5e/v6e, 64 MiB v7x
    except Exception:
        cap = 64 << 20
    return int(min(max(needed, 32 << 20), cap - (16 << 20)))


def distance_model(features, weight_t, *, target_step_bytes=4 << 20):
    """features: (B, 3, D) f32; weight_t: (D, H) f32 (Linear weight pre-transposed).

    Returns (B, 3) f32. The Linear bias is intentionally not an input: it cancels
    exactly in every pairwise difference (eps is added after the difference).
    """
    B, T, D = features.shape
    assert T == 3, "DistanceModel expects triplets along axis 1"
    H = weight_t.shape[1]

    # Free row-major collapse (no HBM transpose / copy): each row is [x0 | x1 | x2].
    x = features.astype(jnp.float32).reshape(B, 3 * D)

    tb = _choose_tile(B, D, target_step_bytes)
    grid = (pl.cdiv(B, tb),)   # ragged tail handled by Pallas edge-block clipping (no jnp.pad)

    out_t = pl.pallas_call(
        _distance_kernel,
        out_shape=jax.ShapeDtypeStruct((3, B), jnp.float32),
        grid_spec=pltpu.PrefetchScalarGridSpec(
            num_scalar_prefetch=0,
            grid=grid,
            in_specs=[
                pl.BlockSpec((tb, 3 * D), lambda i: (i, 0)),
                pl.BlockSpec((D, H), lambda i: (0, 0)),   # grid-invariant weight
            ],
            out_specs=pl.BlockSpec((3, tb), lambda i: (0, i)),
        ),
        compiler_params=pltpu.CompilerParams(
            dimension_semantics=("parallel",),
            vmem_limit_bytes=_vmem_limit_bytes(tb, D, H),
        ),
    )(x, weight_t)

    return jnp.transpose(out_t)  # (B, 3); only 12*B bytes of traffic


def _reference(features, weight_t, bias):
    """Pure-JAX reference of the full PyTorch forward (Linear WITH bias)."""
    y = jnp.einsum("btd,dh->bth", features, weight_t) + bias

    def pdist(a, c):
        diff = a - c + EPS
        return jnp.sqrt(jnp.sum(diff * diff, axis=-1))

    return -jnp.stack([pdist(y[:, 1], y[:, 2]),
                       pdist(y[:, 0], y[:, 2]),
                       pdist(y[:, 0], y[:, 1])], axis=1)


if __name__ == "__main__":
    B, D, H = 256, 32, 32
    key = jax.random.PRNGKey(0)
    k_x, k_w, k_b = jax.random.split(key, 3)

    features = jax.random.normal(k_x, (B, 3, D), dtype=jnp.float32)
    # Deterministic Linear(D, H) params (PyTorch-style uniform bound 1/sqrt(D)),
    # weight stored pre-transposed as (D, H).
    bound = 1.0 / (D ** 0.5)
    weight_t = jax.random.uniform(k_w, (D, H), jnp.float32, -bound, bound)
    bias = jax.random.uniform(k_b, (H,), jnp.float32, -bound, bound)

    out = distance_model(features, weight_t)   # auto tb=128 -> grid=(2,): exercises tiling / both v7x TCs
    out = jax.block_until_ready(out)

    ref = _reference(features, weight_t, bias)  # bias cancels in every pairwise diff
    assert out.shape == (B, 3)
    assert jnp.allclose(out, ref, atol=1e-4, rtol=1e-4), "mismatch vs reference"
    print("KERNEL_OK")
</pallas_src>

<mosaic_0001>
module attributes {stable_mosaic.version = 11 : i64} {
  func.func @_distance_kernel(%arg0: i32, %arg1: memref<128x96xf32, #tpu.memory_space<vmem>>, %arg2: memref<32x32xf32, #tpu.memory_space<vmem>>, %arg3: memref<3x128xf32, #tpu.memory_space<vmem>>) attributes {dimension_semantics = [#tpu.dimension_semantics<parallel>], iteration_bounds = array<i64: 2>, scalar_prefetch = 0 : i64, scratch_operands = 0 : i64, tpu.core_type = #tpu.core_type<tc>, window_params = [{transform_indices = @transform_0, window_bounds = array<i64: 128, 96>}, {pipeline_mode = #tpu.pipeline_mode<synchronous>, transform_indices = @transform_1, window_bounds = array<i64: 32, 32>}, {transform_indices = @transform_2, window_bounds = array<i64: 3, 128>}]} {
    %c0 = arith.constant 0 : index
    %c0_0 = arith.constant 0 : index
    %0 = vector.load %arg1[%c0, %c0_0] : memref<128x96xf32, #tpu.memory_space<vmem>>, vector<128x96xf32>
    %1 = vector.extract_strided_slice %0 {offsets = [0, 0], sizes = [128, 32], strides = [1, 1]} : vector<128x96xf32> to vector<128x32xf32>
    %2 = vector.extract_strided_slice %0 {offsets = [0, 32], sizes = [128, 32], strides = [1, 1]} : vector<128x96xf32> to vector<128x32xf32>
    %3 = vector.extract_strided_slice %0 {offsets = [0, 64], sizes = [128, 32], strides = [1, 1]} : vector<128x96xf32> to vector<128x32xf32>
    %c0_1 = arith.constant 0 : index
    %c0_2 = arith.constant 0 : index
    %4 = vector.load %arg2[%c0_1, %c0_2] : memref<32x32xf32, #tpu.memory_space<vmem>>, vector<32x32xf32>
    %5 = arith.subf %2, %3 : vector<128x32xf32>
    %cst = arith.constant dense<0.000000e+00> : vector<128x32xf32>
    %6 = tpu.matmul %5, %4, %cst {dimension_numbers = #tpu.dot_dimension_numbers<[1], [0], [0], [1], [0, 0, 1, 1], [], []>} : vector<128x32xf32>, vector<32x32xf32>, vector<128x32xf32> -> vector<128x32xf32>
    %7 = arith.subf %1, %3 : vector<128x32xf32>
    %cst_3 = arith.constant dense<0.000000e+00> : vector<128x32xf32>
    %8 = tpu.matmul %7, %4, %cst_3 {dimension_numbers = #tpu.dot_dimension_numbers<[1], [0], [0], [1], [0, 0, 1, 1], [], []>} : vector<128x32xf32>, vector<32x32xf32>, vector<128x32xf32> -> vector<128x32xf32>
    %9 = arith.subf %8, %6 : vector<128x32xf32>
    %cst_4 = arith.constant 9.99999997E-7 : f32
    %10 = vector.broadcast %cst_4 : f32 to vector<128x32xf32>
    %11 = arith.addf %6, %10 : vector<128x32xf32>
    %12 = arith.mulf %11, %11 : vector<128x32xf32>
    %cst_5 = arith.constant dense<0.000000e+00> : vector<128xf32>
    %13 = vector.multi_reduction <add>, %12, %cst_5 [1] : vector<128x32xf32> to vector<128xf32>
    %14 = math.sqrt %13 : vector<128xf32>
    %cst_6 = arith.constant 0.000000e+00 : f32
    %15 = vector.broadcast %cst_6 : f32 to vector<128xf32>
    %16 = arith.subf %15, %14 : vector<128xf32>
    %c0_7 = arith.constant 0 : index
    %c0_8 = arith.constant 0 : index
    %17 = vector.load %arg3[%c0_7, %c0_8] : memref<3x128xf32, #tpu.memory_space<vmem>>, vector<1x128xf32>
    %18 = vector.shape_cast %17 : vector<1x128xf32> to vector<128xf32>
    %19 = vector.shape_cast %16 : vector<128xf32> to vector<1x128xf32>
    tpu.vector_store %arg3[%c0_7, %c0_8], %19 {strides = array<i32>} : memref<3x128xf32, #tpu.memory_space<vmem>>, vector<1x128xf32>,
    %cst_9 = arith.constant 9.99999997E-7 : f32
    %20 = vector.broadcast %cst_9 : f32 to vector<128x32xf32>
    %21 = arith.addf %8, %20 : vector<128x32xf32>
    %22 = arith.mulf %21, %21 : vector<128x32xf32>
    %cst_10 = arith.constant dense<0.000000e+00> : vector<128xf32>
    %23 = vector.multi_reduction <add>, %22, %cst_10 [1] : vector<128x32xf32> to vector<128xf32>
    %24 = math.sqrt %23 : vector<128xf32>
    %cst_11 = arith.constant 0.000000e+00 : f32
    %25 = vector.broadcast %cst_11 : f32 to vector<128xf32>
    %26 = arith.subf %25, %24 : vector<128xf32>
    %c1 = arith.constant 1 : index
    %c0_12 = arith.constant 0 : index
    %27 = vector.load %arg3[%c1, %c0_12] : memref<3x128xf32, #tpu.memory_space<vmem>>, vector<1x128xf32>
    %28 = vector.shape_cast %27 : vector<1x128xf32> to vector<128xf32>
    %29 = vector.shape_cast %26 : vector<128xf32> to vector<1x128xf32>
    tpu.vector_store %arg3[%c1, %c0_12], %29 {strides = array<i32>} : memref<3x128xf32, #tpu.memory_space<vmem>>, vector<1x128xf32>,
    %cst_13 = arith.constant 9.99999997E-7 : f32
    %30 = vector.broadcast %cst_13 : f32 to vector<128x32xf32>
    %31 = arith.addf %9, %30 : vector<128x32xf32>
    %32 = arith.mulf %31, %31 : vector<128x32xf32>
    %cst_14 = arith.constant dense<0.000000e+00> : vector<128xf32>
    %33 = vector.multi_reduction <add>, %32, %cst_14 [1] : vector<128x32xf32> to vector<128xf32>
    %34 = math.sqrt %33 : vector<128xf32>
    %cst_15 = arith.constant 0.000000e+00 : f32
    %35 = vector.broadcast %cst_15 : f32 to vector<128xf32>
    %36 = arith.subf %35, %34 : vector<128xf32>
    %c2 = arith.constant 2 : index
    %c0_16 = arith.constant 0 : index
    %37 = vector.load %arg3[%c2, %c0_16] : memref<3x128xf32, #tpu.memory_space<vmem>>, vector<1x128xf32>
    %38 = vector.shape_cast %37 : vector<1x128xf32> to vector<128xf32>
    %39 = vector.shape_cast %36 : vector<128xf32> to vector<1x128xf32>
    tpu.vector_store %arg3[%c2, %c0_16], %39 {strides = array<i32>} : memref<3x128xf32, #tpu.memory_space<vmem>>, vector<1x128xf32>,
    return
  }
  func.func @transform_0(%arg0: i32) -> (i32, i32) {
    %c0_i32 = arith.constant 0 : i32
    %c0_i32_0 = arith.constant 0 : i32
    return %arg0, %c0_i32 : i32, i32
  }
  func.func @transform_1(%arg0: i32) -> (i32, i32) {
    %c0_i32 = arith.constant 0 : i32
    %c0_i32_0 = arith.constant 0 : i32
    %c0_i32_1 = arith.constant 0 : i32
    return %c0_i32, %c0_i32_0 : i32, i32
  }
  func.func @transform_2(%arg0: i32) -> (i32, i32) {
    %c0_i32 = arith.constant 0 : i32
    %c0_i32_0 = arith.constant 0 : i32
    return %c0_i32, %arg0 : i32, i32
  }
}

</mosaic_0001>

<llo_original>
// kernel: tpu_custom_call.1
$region0: #{tpu_custom_call.1}
  #allocation0 [shape = 'u32[]', space=smem, size = 0x4, offset = 0x4, fixed_abs, tag = 'smem constant byte address 0x4 - core index']
  #allocation1 [shape = 'u32[72,128]{1,0:T(1,128)}', space=vmem, size = 0x9000, scoped, tag = 'internal scratch']
  %s0 = inlined_call_operand.vmem [shape: f32[256,96], index: 0, kind: input, shape index: {}]
  %s1 = inlined_call_operand.vmem [shape: f32[32,32], index: 1, kind: input, shape index: {}]
  %s2 = inlined_call_operand.hbm [shape: f32[3,256], index: 2, kind: output, shape index: {}]
  %s3 = sld [smem:[#allocation0]]
  $region41: #{tpu_custom_call.1} parent=0
    _
  %s5 = ssub.s32 1, %s3
  %s6 = scalar_select 0, %s5, %s3
  $region1: #{tpu_custom_call.1} parent=0
    #allocation2 [shape = 'u8[4096]{0}', space=vmem, size = 0x1000, scoped, tag = 'output window, operand 0']
    #allocation3 [shape = 's32[2]{0}', space=sflag, size = 0x8, scoped, tag = 'scoped memory for tpu_custom_call.1']
    %7 = vsyncpa [#allocation3], 0
    %s8 = scalar_lea.sflag [#allocation3], 1
    %9 = vsyncpa %s8, 0
    loop: start=0, step=1, limit=4
    $region2: #{tpu_custom_call.1} parent=1 // loop_pre_header
      _
    $region3: #{tpu_custom_call.1} parent=1 // loop_header
      %s11 = sphi 0, %s15
      %p12 = scmp.ge.s32.totalorder %s11, 4
      %s21 = sphi 0, %s23
      %s24 = sphi 0, %s21
      %s25 = sphi 0, %s24
      %s41 = sphi 0, %s25
      %s45 = sphi 0, %s45
      %s47 = sphi 0, %s45
      %s48 = sphi 0, %s47
      %s62 = sphi 0, %s48
      %s68 = sphi 0, %s70
      %s71 = sphi 0, %s68
      %s72 = sphi 0, %s71
      %s88 = sphi 0, %s72
    $region4: #{tpu_custom_call.1} parent=1 // loop_header_branch
      %14 = sbr.rel (%p12) target = $region8
    $region5: #{tpu_custom_call.1} parent=1 // loop_body
      %s16 = ssub.s32 %s11, 1
      %s17 = ssub.s32 %s11, 2
      %s18 = sadd.s32 %s11, 1
      %s19 = ssub.s32 %s11, %s18
      %p20 = scmp.eq.s32.totalorder %s19, 0
      %s22 = sadd.s32 %s21, 1
      %s23 = scalar_select %p20, %s21, %s22
      %p26 = pneg %p20
      %p27 = scmp.eq.s32.totalorder %s11, 1
      %p28 = por %p26, %p27
      %p29 = scmp.ne.s32.totalorder %s21, %s24
      %p30 = scmp.eq.s32.totalorder %s11, 0
      %p31 = por %p29, %p30
      %p32 = scmp.ne.s32.totalorder %s21, %s24
      %p33 = scmp.eq.s32.totalorder %s16, 1
      %p34 = por %p32, %p33
      %p35 = scmp.ne.s32.totalorder %s24, %s25
      %p36 = scmp.eq.s32.totalorder %s16, 0
      %p37 = por %p35, %p36
      %p38 = scmp.ne.s32.totalorder %s24, %s25
      %p39 = scmp.eq.s32.totalorder %s17, 1
      %p40 = por %p38, %p39
      %p42 = scmp.ne.s32.totalorder %s25, %s41
      %p43 = scmp.eq.s32.totalorder %s17, 0
      %p44 = por %p42, %p43
      %s46 = sadd.s32 %s45, 1
      %p49 = scmp.eq.s32.totalorder %s11, 1
      %p50 = scmp.ne.s32.totalorder %s45, %s47
      %p51 = scmp.eq.s32.totalorder %s11, 0
      %p52 = por %p50, %p51
      %p53 = scmp.ne.s32.totalorder %s45, %s47
      %p54 = scmp.eq.s32.totalorder %s16, 1
      %p55 = por %p53, %p54
      %p56 = scmp.ne.s32.totalorder %s47, %s48
      %p57 = scmp.eq.s32.totalorder %s16, 0
      %p58 = por %p56, %p57
      %p59 = scmp.ne.s32.totalorder %s47, %s48
      %p60 = scmp.eq.s32.totalorder %s17, 1
      %p61 = por %p59, %p60
      %p63 = scmp.ne.s32.totalorder %s48, %s62
      %p64 = scmp.eq.s32.totalorder %s17, 0
      %p65 = por %p63, %p64
      %s66 = ssub.s32 %s11, %s18
      %p67 = scmp.eq.s32.totalorder %s66, 0
      %s69 = sadd.s32 %s68, 1
      %s70 = scalar_select %p67, %s68, %s69
      %p73 = pneg %p67
      %p74 = scmp.eq.s32.totalorder %s11, 1
      %p75 = por %p73, %p74
      %p76 = scmp.ne.s32.totalorder %s68, %s71
      %p77 = scmp.eq.s32.totalorder %s11, 0
      %p78 = por %p76, %p77
      %p79 = scmp.ne.s32.totalorder %s68, %s71
      %p80 = scmp.eq.s32.totalorder %s16, 1
      %p81 = por %p79, %p80
      %p82 = scmp.ne.s32.totalorder %s71, %s72
      %p83 = scmp.eq.s32.totalorder %s16, 0
      %p84 = por %p82, %p83
      %p85 = scmp.ne.s32.totalorder %s71, %s72
      %p86 = scmp.eq.s32.totalorder %s17, 1
      %p87 = por %p85, %p86
      %p89 = scmp.ne.s32.totalorder %s72, %s88
      %p90 = scmp.eq.s32.totalorder %s17, 0
      %p91 = por %p89, %p90
      %p92 = scmp.le.s32.totalorder 1, %s11
      %p93 = scmp.lt.s32.totalorder %s11, 3
      %p94 = pnand %p92, %p93
      %p95 = pneg %p94
      // Predicated region
      $region9: #{tpu_custom_call.1} parent=5 // pred_check
        _
      $region10: #{tpu_custom_call.1} parent=5 // pred_check_branch
        %97 = sbr.rel (%p94) target = $region12
      $region11: #{tpu_custom_call.1} parent=5 // pred_region
        %s98 = ssub.s32 %s11, 1
        // Predicated region
        $region13: #{tpu_custom_call.1} parent=11 // pred_check
          %p99 = pneg %p58
        $region14: #{tpu_custom_call.1} parent=11 // pred_check_branch
          %101 = sbr.rel (%p99) target = $region16
        $region15: #{tpu_custom_call.1} parent=11 // pred_region
          _
        $region16: #{tpu_custom_call.1} parent=11 // pred_fallthru
          _
      $region12: #{tpu_custom_call.1} parent=5 // pred_fallthru
        _
      %p102 = scmp.lt.s32.totalorder %s11, 2
      // Predicated region
      $region17: #{tpu_custom_call.1} parent=5 // pred_check
        %p103 = pneg %p102
      $region18: #{tpu_custom_call.1} parent=5 // pred_check_branch
        %105 = sbr.rel (%p103) target = $region20
      $region19: #{tpu_custom_call.1} parent=5 // pred_region
        // Predicated region
        $region21: #{tpu_custom_call.1} parent=19 // pred_check
          %p106 = pneg %p31
        $region22: #{tpu_custom_call.1} parent=19 // pred_check_branch
          %108 = sbr.rel (%p106) target = $region24
        $region23: #{tpu_custom_call.1} parent=19 // pred_region
          %s109 = smul.u32 16, %s11
          %p110 = scmp.lt.s32.totalorder %s109, 31
          %s111 = scalar_select %p110, %s109, 31
          %s112 = smul.addr %s111, 8
          %s113 = scalar_lea.vmem %s0, %s112
          %s114 = smul.u32 16, %s11
        $region24: #{tpu_custom_call.1} parent=19 // pred_fallthru
          _
      $region20: #{tpu_custom_call.1} parent=5 // pred_fallthru
        _
      %p115 = scmp.le.s32.totalorder 1, %s11
      %p116 = scmp.lt.s32.totalorder %s11, 3
      %p117 = pnand %p115, %p116
      %p118 = pneg %p117
      // Predicated region
      $region25: #{tpu_custom_call.1} parent=5 // pred_check
        _
      $region26: #{tpu_custom_call.1} parent=5 // pred_check_branch
        %120 = sbr.rel (%p117) target = $region28
      $region27: #{tpu_custom_call.1} parent=5 // pred_region
        %s121 = ssub.s32 %s11, 1
        %s122 = smul.u32 16, %s16
        %p123 = scmp.lt.s32.totalorder %s122, 31
        %s124 = scalar_select %p123, %s122, 31
        %s125 = smul.addr %s124, 8
        %s126 = scalar_lea.vmem %s0, %s125
        %p127 = pneg %p37
        %p128 = pneg %p34
        %p129 = pneg %p58
        %p130 = pneg %p55
        %p131 = pneg %p84
        %p132 = pneg %p81
        %s133 = sand.u32 %s71, 1
        %s134 = scalar_lea.sflag [#allocation3], %s133
        %s135 = sand.u32 %s71, 1
        %s136 = smul.addr %s135, 4
        %s137 = scalar_lea.vmem [#allocation2], %s136
        %s138 = smul.u32 16, %s16
        %p139 = scmp.lt.s32.totalorder %s138, 31
        %s140 = scalar_select %p139, %s138, 31
        %s141 = smul.addr %s140, 8
        %s142 = scalar_lea.vmem %s0, %s141
        %s143 = smul.u32 16, %s16
        %v144 = vld [vmem:[%s142] sm:$0xff]
        %v145 = vld [vmem:[%s142 + $0x8] sm:$0xff]
        %v146 = vld [vmem:[%s142 + $0x10] sm:$0xff]
        %v147 = vld [vmem:[%s142 + $0x18] sm:$0xff]
        %v148 = vld [vmem:[%s142 + $0x20] sm:$0xff]
        %v149 = vld [vmem:[%s142 + $0x28] sm:$0xff]
        %v150 = vld [vmem:[%s142 + $0x30] sm:$0xff]
        %v151 = vld [vmem:[%s142 + $0x38] sm:$0xff]
        %v152 = vld [vmem:[%s142 + $0x40] sm:$0xff]
        %v153 = vld [vmem:[%s142 + $0x48] sm:$0xff]
        %v154 = vld [vmem:[%s142 + $0x50] sm:$0xff]
        %v155 = vld [vmem:[%s142 + $0x58] sm:$0xff]
        %v156 = vld [vmem:[%s142 + $0x60] sm:$0xff]
        %v157 = vld [vmem:[%s142 + $0x68] sm:$0xff]
        %v158 = vld [vmem:[%s142 + $0x70] sm:$0xff]
        %v159 = vld [vmem:[%s142 + $0x78] sm:$0xff]
        %v160 = vld [vmem:[%s1] sm:$0xff]
        %v161 = vld [vmem:[%s1 + $0x8] sm:$0xff]
        %v162 = vld [vmem:[%s1 + $0x10] sm:$0xff]
        %v163 = vld [vmem:[%s1 + $0x18] sm:$0xff]
        %180 = vrot.lane.b32.xlu0 %v144, 96
        %v181 = vpop.permute.xlu0 %180
        %182 = vrot.lane.b32.xlu0 %v145, 96
        %v183 = vpop.permute.xlu0 %182
        %184 = vrot.lane.b32.xlu0 %v146, 96
        %v185 = vpop.permute.xlu0 %184
        %186 = vrot.lane.b32.xlu0 %v147, 96
        %v187 = vpop.permute.xlu0 %186
        %188 = vrot.lane.b32.xlu0 %v148, 96
        %v189 = vpop.permute.xlu0 %188
        %190 = vrot.lane.b32.xlu0 %v149, 96
        %v191 = vpop.permute.xlu0 %190
        %192 = vrot.lane.b32.xlu0 %v150, 96
        %v193 = vpop.permute.xlu0 %192
        %194 = vrot.lane.b32.xlu0 %v151, 96
        %v195 = vpop.permute.xlu0 %194
        %196 = vrot.lane.b32.xlu0 %v152, 96
        %v197 = vpop.permute.xlu0 %196
        %198 = vrot.lane.b32.xlu0 %v153, 96
        %v199 = vpop.permute.xlu0 %198
        %200 = vrot.lane.b32.xlu0 %v154, 96
        %v201 = vpop.permute.xlu0 %200
        %202 = vrot.lane.b32.xlu0 %v155, 96
        %v203 = vpop.permute.xlu0 %202
        %204 = vrot.lane.b32.xlu0 %v156, 96
        %v205 = vpop.permute.xlu0 %204
        %206 = vrot.lane.b32.xlu0 %v157, 96
        %v207 = vpop.permute.xlu0 %206
        %208 = vrot.lane.b32.xlu0 %v158, 96
        %v209 = vpop.permute.xlu0 %208
        %210 = vrot.lane.b32.xlu0 %v159, 96
        %v211 = vpop.permute.xlu0 %210
        %v228 = vsub.f32 %v144, %v181
        %v229 = vsub.f32 %v145, %v183
        %v230 = vsub.f32 %v146, %v185
        %v231 = vsub.f32 %v147, %v187
        %v232 = vsub.f32 %v148, %v189
        %v233 = vsub.f32 %v149, %v191
        %v234 = vsub.f32 %v150, %v193
        %v235 = vsub.f32 %v151, %v195
        %v236 = vsub.f32 %v152, %v197
        %v237 = vsub.f32 %v153, %v199
        %v238 = vsub.f32 %v154, %v201
        %v239 = vsub.f32 %v155, %v203
        %v240 = vsub.f32 %v156, %v205
        %v241 = vsub.f32 %v157, %v207
        %v242 = vsub.f32 %v158, %v209
        %v243 = vsub.f32 %v159, %v211
        %260 = vrot.lane.b32.xlu0 %v228, 96
        %v261 = vpop.permute.xlu0 %260
        %262 = vrot.lane.b32.xlu0 %v229, 96
        %v263 = vpop.permute.xlu0 %262
        %264 = vrot.lane.b32.xlu0 %v230, 96
        %v265 = vpop.permute.xlu0 %264
        %266 = vrot.lane.b32.xlu0 %v231, 96
        %v267 = vpop.permute.xlu0 %266
        %268 = vrot.lane.b32.xlu0 %v232, 96
        %v269 = vpop.permute.xlu0 %268
        %270 = vrot.lane.b32.xlu0 %v233, 96
        %v271 = vpop.permute.xlu0 %270
        %272 = vrot.lane.b32.xlu0 %v234, 96
        %v273 = vpop.permute.xlu0 %272
        %274 = vrot.lane.b32.xlu0 %v235, 96
        %v275 = vpop.permute.xlu0 %274
        %276 = vrot.lane.b32.xlu0 %v236, 96
        %v277 = vpop.permute.xlu0 %276
        %278 = vrot.lane.b32.xlu0 %v237, 96
        %v279 = vpop.permute.xlu0 %278
        %280 = vrot.lane.b32.xlu0 %v238, 96
        %v281 = vpop.permute.xlu0 %280
        %282 = vrot.lane.b32.xlu0 %v239, 96
        %v283 = vpop.permute.xlu0 %282
        %284 = vrot.lane.b32.xlu0 %v240, 96
        %v285 = vpop.permute.xlu0 %284
        %286 = vrot.lane.b32.xlu0 %v241, 96
        %v287 = vpop.permute.xlu0 %286
        %288 = vrot.lane.b32.xlu0 %v242, 96
        %v289 = vpop.permute.xlu0 %288
        %290 = vrot.lane.b32.xlu0 %v243, 96
        %v291 = vpop.permute.xlu0 %290
        %vm292 = vcmask 261120
        %v293 = vsel %vm292, %v261, 0
        %v295 = vsel %vm292, %v263, 0
        %v297 = vsel %vm292, %v265, 0
        %v299 = vsel %vm292, %v267, 0
        %v301 = vsel %vm292, %v269, 0
        %v303 = vsel %vm292, %v271, 0
        %v305 = vsel %vm292, %v273, 0
        %v307 = vsel %vm292, %v275, 0
        %v309 = vsel %vm292, %v277, 0
        %v311 = vsel %vm292, %v279, 0
        %v313 = vsel %vm292, %v281, 0
        %v315 = vsel %vm292, %v283, 0
        %v317 = vsel %vm292, %v285, 0
        %v319 = vsel %vm292, %v287, 0
        %v321 = vsel %vm292, %v289, 0
        %v323 = vsel %vm292, %v291, 0
        %325 = vmatpush.msra.mxu0 0.0
        %326 = vmatpush.msra.mxu0 0.0
        %327 = vmatpush.msra.mxu0 0.0
        %328 = vmatpush.msra.mxu0 0.0
        %329 = vmatpush.msra.mxu0 0.0
        %330 = vmatpush.msra.mxu0 0.0
        %331 = vmatpush.msra.mxu0 0.0
        %332 = vmatpush.msra.mxu0 0.0
        %333 = vmatpush.msra.mxu0 0.0
        %334 = vmatpush.msra.mxu0 0.0
        %335 = vmatpush.msra.mxu0 0.0
        %336 = vmatpush.msra.mxu0 0.0
        %337 = vmatpush.msra.mxu0 %v163
        %338 = vmatpush.msra.mxu0 %v162
        %339 = vmatpush.msra.mxu0 %v161
        %340 = vmatpush.msra.mxu0 %v160
        %341 = vmatmul.f32.gmra.mxu0 %v293
        %v342 = vpop.f32.mrf.mxu0
        %v343 = vadd.f32 0.0, %v342
        %344 = vmatmul.f32.gmra.mxu0 %v295
        %v345 = vpop.f32.mrf.mxu0
        %v346 = vadd.f32 0.0, %v345
        %347 = vmatmul.f32.gmra.mxu0 %v297
        %v348 = vpop.f32.mrf.mxu0
        %v349 = vadd.f32 0.0, %v348
        %350 = vmatmul.f32.gmra.mxu0 %v299
        %v351 = vpop.f32.mrf.mxu0
        %v352 = vadd.f32 0.0, %v351
        %353 = vmatmul.f32.gmra.mxu0 %v301
        %v354 = vpop.f32.mrf.mxu0
        %v355 = vadd.f32 0.0, %v354
        %356 = vmatmul.f32.gmra.mxu0 %v303
        %v357 = vpop.f32.mrf.mxu0
        %v358 = vadd.f32 0.0, %v357
        %359 = vmatmul.f32.gmra.mxu0 %v305
        %v360 = vpop.f32.mrf.mxu0
        %v361 = vadd.f32 0.0, %v360
        %362 = vmatmul.f32.gmra.mxu0 %v307
        %v363 = vpop.f32.mrf.mxu0
        %v364 = vadd.f32 0.0, %v363
        %365 = vmatmul.f32.gmra.mxu0 %v309
        %v366 = vpop.f32.mrf.mxu0
        %v367 = vadd.f32 0.0, %v366
        %368 = vmatmul.f32.gmra.mxu0 %v311
        %v369 = vpop.f32.mrf.mxu0
        %v370 = vadd.f32 0.0, %v369
        %371 = vmatmul.f32.gmra.mxu0 %v313
        %v372 = vpop.f32.mrf.mxu0
        %v373 = vadd.f32 0.0, %v372
        %374 = vmatmul.f32.gmra.mxu0 %v315
        %v375 = vpop.f32.mrf.mxu0
        %v376 = vadd.f32 0.0, %v375
        %377 = vmatmul.f32.gmra.mxu0 %v317
        %v378 = vpop.f32.mrf.mxu0
        %v379 = vadd.f32 0.0, %v378
        %380 = vmatmul.f32.gmra.mxu0 %v319
        %v381 = vpop.f32.mrf.mxu0
        %v382 = vadd.f32 0.0, %v381
        %383 = vmatmul.f32.gmra.mxu0 %v321
        %v384 = vpop.f32.mrf.mxu0
        %v385 = vadd.f32 0.0, %v384
        %386 = vmatmul.f32.gmra.mxu0 %v323
        %v387 = vpop.f32.mrf.mxu0
        %v388 = vadd.f32 0.0, %v387
        %389 = vdwg.mxu0
        %390 = vrot.lane.b32.xlu0 %v144, 64
        %v391 = vpop.permute.xlu0 %390
        %392 = vrot.lane.b32.xlu0 %v145, 64
        %v393 = vpop.permute.xlu0 %392
        %394 = vrot.lane.b32.xlu0 %v146, 64
        %v395 = vpop.permute.xlu0 %394
        %396 = vrot.lane.b32.xlu0 %v147, 64
        %v397 = vpop.permute.xlu0 %396
        %398 = vrot.lane.b32.xlu0 %v148, 64
        %v399 = vpop.permute.xlu0 %398
        %400 = vrot.lane.b32.xlu0 %v149, 64
        %v401 = vpop.permute.xlu0 %400
        %402 = vrot.lane.b32.xlu0 %v150, 64
        %v403 = vpop.permute.xlu0 %402
        %404 = vrot.lane.b32.xlu0 %v151, 64
        %v405 = vpop.permute.xlu0 %404
        %406 = vrot.lane.b32.xlu0 %v152, 64
        %v407 = vpop.permute.xlu0 %406
        %408 = vrot.lane.b32.xlu0 %v153, 64
        %v409 = vpop.permute.xlu0 %408
        %410 = vrot.lane.b32.xlu0 %v154, 64
        %v411 = vpop.permute.xlu0 %410
        %412 = vrot.lane.b32.xlu0 %v155, 64
        %v413 = vpop.permute.xlu0 %412
        %414 = vrot.lane.b32.xlu0 %v156, 64
        %v415 = vpop.permute.xlu0 %414
        %416 = vrot.lane.b32.xlu0 %v157, 64
        %v417 = vpop.permute.xlu0 %416
        %418 = vrot.lane.b32.xlu0 %v158, 64
        %v419 = vpop.permute.xlu0 %418
        %420 = vrot.lane.b32.xlu0 %v159, 64
        %v421 = vpop.permute.xlu0 %420
        %v438 = vsub.f32 %v144, %v391
        %v439 = vsub.f32 %v145, %v393
        %v440 = vsub.f32 %v146, %v395
        %v441 = vsub.f32 %v147, %v397
        %v442 = vsub.f32 %v148, %v399
        %v443 = vsub.f32 %v149, %v401
        %v444 = vsub.f32 %v150, %v403
        %v445 = vsub.f32 %v151, %v405
        %v446 = vsub.f32 %v152, %v407
        %v447 = vsub.f32 %v153, %v409
        %v448 = vsub.f32 %v154, %v411
        %v449 = vsub.f32 %v155, %v413
        %v450 = vsub.f32 %v156, %v415
        %v451 = vsub.f32 %v157, %v417
        %v452 = vsub.f32 %v158, %v419
        %v453 = vsub.f32 %v159, %v421
        %v455 = vsel %vm292, %v438, 0
        %v458 = vsel %vm292, %v439, 0
        %v461 = vsel %vm292, %v440, 0
        %v464 = vsel %vm292, %v441, 0
        %v467 = vsel %vm292, %v442, 0
        %v470 = vsel %vm292, %v443, 0
        %v473 = vsel %vm292, %v444, 0
        %v476 = vsel %vm292, %v445, 0
        %v479 = vsel %vm292, %v446, 0
        %v482 = vsel %vm292, %v447, 0
        %v485 = vsel %vm292, %v448, 0
        %v488 = vsel %vm292, %v449, 0
        %v491 = vsel %vm292, %v450, 0
        %v494 = vsel %vm292, %v451, 0
        %v497 = vsel %vm292, %v452, 0
        %v500 = vsel %vm292, %v453, 0
        %502 = vmatpush.msra.mxu0 0.0
        %503 = vmatpush.msra.mxu0 0.0
        %504 = vmatpush.msra.mxu0 0.0
        %505 = vmatpush.msra.mxu0 0.0
        %506 = vmatpush.msra.mxu0 0.0
        %507 = vmatpush.msra.mxu0 0.0
        %508 = vmatpush.msra.mxu0 0.0
        %509 = vmatpush.msra.mxu0 0.0
        %510 = vmatpush.msra.mxu0 0.0
        %511 = vmatpush.msra.mxu0 0.0
        %512 = vmatpush.msra.mxu0 0.0
        %513 = vmatpush.msra.mxu0 0.0
        %514 = vmatpush.msra.mxu0 %v163
        %515 = vmatpush.msra.mxu0 %v162
        %516 = vmatpush.msra.mxu0 %v161
        %517 = vmatpush.msra.mxu0 %v160
        %518 = vmatmul.f32.gmra.mxu0 %v455
        %v519 = vpop.f32.mrf.mxu0
        %v520 = vadd.f32 0.0, %v519
        %521 = vmatmul.f32.gmra.mxu0 %v458
        %v522 = vpop.f32.mrf.mxu0
        %v523 = vadd.f32 0.0, %v522
        %524 = vmatmul.f32.gmra.mxu0 %v461
        %v525 = vpop.f32.mrf.mxu0
        %v526 = vadd.f32 0.0, %v525
        %527 = vmatmul.f32.gmra.mxu0 %v464
        %v528 = vpop.f32.mrf.mxu0
        %v529 = vadd.f32 0.0, %v528
        %530 = vmatmul.f32.gmra.mxu0 %v467
        %v531 = vpop.f32.mrf.mxu0
        %v532 = vadd.f32 0.0, %v531
        %533 = vmatmul.f32.gmra.mxu0 %v470
        %v534 = vpop.f32.mrf.mxu0
        %v535 = vadd.f32 0.0, %v534
        %536 = vmatmul.f32.gmra.mxu0 %v473
        %v537 = vpop.f32.mrf.mxu0
        %v538 = vadd.f32 0.0, %v537
        %539 = vmatmul.f32.gmra.mxu0 %v476
        %v540 = vpop.f32.mrf.mxu0
        %v541 = vadd.f32 0.0, %v540
        %542 = vmatmul.f32.gmra.mxu0 %v479
        %v543 = vpop.f32.mrf.mxu0
        %v544 = vadd.f32 0.0, %v543
        %545 = vmatmul.f32.gmra.mxu0 %v482
        %v546 = vpop.f32.mrf.mxu0
        %v547 = vadd.f32 0.0, %v546
        %548 = vmatmul.f32.gmra.mxu0 %v485
        %v549 = vpop.f32.mrf.mxu0
        %v550 = vadd.f32 0.0, %v549
        %551 = vmatmul.f32.gmra.mxu0 %v488
        %v552 = vpop.f32.mrf.mxu0
        %v553 = vadd.f32 0.0, %v552
        %554 = vmatmul.f32.gmra.mxu0 %v491
        %v555 = vpop.f32.mrf.mxu0
        %v556 = vadd.f32 0.0, %v555
        %557 = vmatmul.f32.gmra.mxu0 %v494
        %v558 = vpop.f32.mrf.mxu0
        %v559 = vadd.f32 0.0, %v558
        %560 = vmatmul.f32.gmra.mxu0 %v497
        %v561 = vpop.f32.mrf.mxu0
        %v562 = vadd.f32 0.0, %v561
        %563 = vmatmul.f32.gmra.mxu0 %v500
        %v564 = vpop.f32.mrf.mxu0
        %v565 = vadd.f32 0.0, %v564
        %566 = vdwg.mxu0
        %v567 = vsub.f32 %v520, %v343
        %v568 = vsub.f32 %v523, %v346
        %v569 = vsub.f32 %v526, %v349
        %v570 = vsub.f32 %v529, %v352
        %v571 = vsub.f32 %v532, %v355
        %v572 = vsub.f32 %v535, %v358
        %v573 = vsub.f32 %v538, %v361
        %v574 = vsub.f32 %v541, %v364
        %v575 = vsub.f32 %v544, %v367
        %v576 = vsub.f32 %v547, %v370
        %v577 = vsub.f32 %v550, %v373
        %v578 = vsub.f32 %v553, %v376
        %v579 = vsub.f32 %v556, %v379
        %v580 = vsub.f32 %v559, %v382
        %v581 = vsub.f32 %v562, %v385
        %v582 = vsub.f32 %v565, %v388
        %v583 = vadd.f32 %v343, 1e-06
        %v584 = vadd.f32 %v346, 1e-06
        %v585 = vadd.f32 %v349, 1e-06
        %v586 = vadd.f32 %v352, 1e-06
        %v587 = vadd.f32 %v355, 1e-06
        %v588 = vadd.f32 %v358, 1e-06
        %v589 = vadd.f32 %v361, 1e-06
        %v590 = vadd.f32 %v364, 1e-06
        %v591 = vadd.f32 %v367, 1e-06
        %v592 = vadd.f32 %v370, 1e-06
        %v593 = vadd.f32 %v373, 1e-06
        %v594 = vadd.f32 %v376, 1e-06
        %v595 = vadd.f32 %v379, 1e-06
        %v596 = vadd.f32 %v382, 1e-06
        %v597 = vadd.f32 %v385, 1e-06
        %v598 = vadd.f32 %v388, 1e-06
        %v599 = vmul.f32 %v583, %v583
        %v600 = vmul.f32 %v584, %v584
        %v601 = vmul.f32 %v585, %v585
        %v602 = vmul.f32 %v586, %v586
        %v603 = vmul.f32 %v587, %v587
        %v604 = vmul.f32 %v588, %v588
        %v605 = vmul.f32 %v589, %v589
        %v606 = vmul.f32 %v590, %v590
        %v607 = vmul.f32 %v591, %v591
        %v608 = vmul.f32 %v592, %v592
        %v609 = vmul.f32 %v593, %v593
        %v610 = vmul.f32 %v594, %v594
        %v611 = vmul.f32 %v595, %v595
        %v612 = vmul.f32 %v596, %v596
        %v613 = vmul.f32 %v597, %v597
        %v614 = vmul.f32 %v598, %v598
        %v615 = vsel %vm292, %v599, 0.0
        %616 = vadd.xlane.f32.xlu0 %v615
        %v617 = vpop.xlane.xlu0 %616
        %v618 = vsel %vm292, %v600, 0.0
        %619 = vadd.xlane.f32.xlu0 %v618
        %v620 = vpop.xlane.xlu0 %619
        %v621 = vsel %vm292, %v601, 0.0
        %622 = vadd.xlane.f32.xlu0 %v621
        %v623 = vpop.xlane.xlu0 %622
        %v624 = vsel %vm292, %v602, 0.0
        %625 = vadd.xlane.f32.xlu0 %v624
        %v626 = vpop.xlane.xlu0 %625
        %v627 = vsel %vm292, %v603, 0.0
        %628 = vadd.xlane.f32.xlu0 %v627
        %v629 = vpop.xlane.xlu0 %628
        %v630 = vsel %vm292, %v604, 0.0
        %631 = vadd.xlane.f32.xlu0 %v630
        %v632 = vpop.xlane.xlu0 %631
        %v633 = vsel %vm292, %v605, 0.0
        %634 = vadd.xlane.f32.xlu0 %v633
        %v635 = vpop.xlane.xlu0 %634
        %v636 = vsel %vm292, %v606, 0.0
        %637 = vadd.xlane.f32.xlu0 %v636
        %v638 = vpop.xlane.xlu0 %637
        %v639 = vsel %vm292, %v607, 0.0
        %640 = vadd.xlane.f32.xlu0 %v639
        %v641 = vpop.xlane.xlu0 %640
        %v642 = vsel %vm292, %v608, 0.0
        %643 = vadd.xlane.f32.xlu0 %v642
        %v644 = vpop.xlane.xlu0 %643
        %v645 = vsel %vm292, %v609, 0.0
        %646 = vadd.xlane.f32.xlu0 %v645
        %v647 = vpop.xlane.xlu0 %646
        %v648 = vsel %vm292, %v610, 0.0
        %649 = vadd.xlane.f32.xlu0 %v648
        %v650 = vpop.xlane.xlu0 %649
        %v651 = vsel %vm292, %v611, 0.0
        %652 = vadd.xlane.f32.xlu0 %v651
        %v653 = vpop.xlane.xlu0 %652
        %v654 = vsel %vm292, %v612, 0.0
        %655 = vadd.xlane.f32.xlu0 %v654
        %v656 = vpop.xlane.xlu0 %655
        %v657 = vsel %vm292, %v613, 0.0
        %658 = vadd.xlane.f32.xlu0 %v657
        %v659 = vpop.xlane.xlu0 %658
        %v660 = vsel %vm292, %v614, 0.0
        %661 = vadd.xlane.f32.xlu0 %v660
        %v662 = vpop.xlane.xlu0 %661
        %v663 = vrsqrt.pop %v617
        %v664 = vmul.f32 %v663, %v617
        %v665 = vmul.f32 %v664, %v663
        %v666 = vmul.f32 0.5, %v665
        %v667 = vsub.f32 1.5, %v666
        %v668 = vmul.f32 %v663, %v667
        %v669 = vmul.f32 %v617, %v668
        %vm670 = vcmp.eq.f32.partialorder %v617, inf
        %v671 = vsel %vm670, %v617, %v669
        %vm672 = vcmp.eq.f32.partialorder %v617, 0.0
        %v673 = vand.u32 %v617, 2147483648
        %v674 = vsel %vm672, %v673, %v671
        %v675 = vrsqrt.pop %v620
        %v676 = vmul.f32 %v675, %v620
        %v677 = vmul.f32 %v676, %v675
        %v678 = vmul.f32 0.5, %v677
        %v679 = vsub.f32 1.5, %v678
        %v680 = vmul.f32 %v675, %v679
        %v681 = vmul.f32 %v620, %v680
        %vm682 = vcmp.eq.f32.partialorder %v620, inf
        %v683 = vsel %vm682, %v620, %v681
        %vm684 = vcmp.eq.f32.partialorder %v620, 0.0
        %v685 = vand.u32 %v620, 2147483648
        %v686 = vsel %vm684, %v685, %v683
        %v687 = vrsqrt.pop %v623
        %v688 = vmul.f32 %v687, %v623
        %v689 = vmul.f32 %v688, %v687
        %v690 = vmul.f32 0.5, %v689
        %v691 = vsub.f32 1.5, %v690
        %v692 = vmul.f32 %v687, %v691
        %v693 = vmul.f32 %v623, %v692
        %vm694 = vcmp.eq.f32.partialorder %v623, inf
        %v695 = vsel %vm694, %v623, %v693
        %vm696 = vcmp.eq.f32.partialorder %v623, 0.0
        %v697 = vand.u32 %v623, 2147483648
        %v698 = vsel %vm696, %v697, %v695
        %v699 = vrsqrt.pop %v626
        %v700 = vmul.f32 %v699, %v626
        %v701 = vmul.f32 %v700, %v699
        %v702 = vmul.f32 0.5, %v701
        %v703 = vsub.f32 1.5, %v702
        %v704 = vmul.f32 %v699, %v703
        %v705 = vmul.f32 %v626, %v704
        %vm706 = vcmp.eq.f32.partialorder %v626, inf
        %v707 = vsel %vm706, %v626, %v705
        %vm708 = vcmp.eq.f32.partialorder %v626, 0.0
        %v709 = vand.u32 %v626, 2147483648
        %v710 = vsel %vm708, %v709, %v707
        %v711 = vrsqrt.pop %v629
        %v712 = vmul.f32 %v711, %v629
        %v713 = vmul.f32 %v712, %v711
        %v714 = vmul.f32 0.5, %v713
        %v715 = vsub.f32 1.5, %v714
        %v716 = vmul.f32 %v711, %v715
        %v717 = vmul.f32 %v629, %v716
        %vm718 = vcmp.eq.f32.partialorder %v629, inf
        %v719 = vsel %vm718, %v629, %v717
        %vm720 = vcmp.eq.f32.partialorder %v629, 0.0
        %v721 = vand.u32 %v629, 2147483648
        %v722 = vsel %vm720, %v721, %v719
        %v723 = vrsqrt.pop %v632
        %v724 = vmul.f32 %v723, %v632
        %v725 = vmul.f32 %v724, %v723
        %v726 = vmul.f32 0.5, %v725
        %v727 = vsub.f32 1.5, %v726
        %v728 = vmul.f32 %v723, %v727
        %v729 = vmul.f32 %v632, %v728
        %vm730 = vcmp.eq.f32.partialorder %v632, inf
        %v731 = vsel %vm730, %v632, %v729
        %vm732 = vcmp.eq.f32.partialorder %v632, 0.0
        %v733 = vand.u32 %v632, 2147483648
        %v734 = vsel %vm732, %v733, %v731
        %v735 = vrsqrt.pop %v635
        %v736 = vmul.f32 %v735, %v635
        %v737 = vmul.f32 %v736, %v735
        %v738 = vmul.f32 0.5, %v737
        %v739 = vsub.f32 1.5, %v738
        %v740 = vmul.f32 %v735, %v739
        %v741 = vmul.f32 %v635, %v740
        %vm742 = vcmp.eq.f32.partialorder %v635, inf
        %v743 = vsel %vm742, %v635, %v741
        %vm744 = vcmp.eq.f32.partialorder %v635, 0.0
        %v745 = vand.u32 %v635, 2147483648
        %v746 = vsel %vm744, %v745, %v743
        %v747 = vrsqrt.pop %v638
        %v748 = vmul.f32 %v747, %v638
        %v749 = vmul.f32 %v748, %v747
        %v750 = vmul.f32 0.5, %v749
        %v751 = vsub.f32 1.5, %v750
        %v752 = vmul.f32 %v747, %v751
        %v753 = vmul.f32 %v638, %v752
        %vm754 = vcmp.eq.f32.partialorder %v638, inf
        %v755 = vsel %vm754, %v638, %v753
        %vm756 = vcmp.eq.f32.partialorder %v638, 0.0
        %v757 = vand.u32 %v638, 2147483648
        %v758 = vsel %vm756, %v757, %v755
        %v759 = vrsqrt.pop %v641
        %v760 = vmul.f32 %v759, %v641
        %v761 = vmul.f32 %v760, %v759
        %v762 = vmul.f32 0.5, %v761
        %v763 = vsub.f32 1.5, %v762
        %v764 = vmul.f32 %v759, %v763
        %v765 = vmul.f32 %v641, %v764
        %vm766 = vcmp.eq.f32.partialorder %v641, inf
        %v767 = vsel %vm766, %v641, %v765
        %vm768 = vcmp.eq.f32.partialorder %v641, 0.0
        %v769 = vand.u32 %v641, 2147483648
        %v770 = vsel %vm768, %v769, %v767
        %v771 = vrsqrt.pop %v644
        %v772 = vmul.f32 %v771, %v644
        %v773 = vmul.f32 %v772, %v771
        %v774 = vmul.f32 0.5, %v773
        %v775 = vsub.f32 1.5, %v774
        %v776 = vmul.f32 %v771, %v775
        %v777 = vmul.f32 %v644, %v776
        %vm778 = vcmp.eq.f32.partialorder %v644, inf
        %v779 = vsel %vm778, %v644, %v777
        %vm780 = vcmp.eq.f32.partialorder %v644, 0.0
        %v781 = vand.u32 %v644, 2147483648
        %v782 = vsel %vm780, %v781, %v779
        %v783 = vrsqrt.pop %v647
        %v784 = vmul.f32 %v783, %v647
        %v785 = vmul.f32 %v784, %v783
        %v786 = vmul.f32 0.5, %v785
        %v787 = vsub.f32 1.5, %v786
        %v788 = vmul.f32 %v783, %v787
        %v789 = vmul.f32 %v647, %v788
        %vm790 = vcmp.eq.f32.partialorder %v647, inf
        %v791 = vsel %vm790, %v647, %v789
        %vm792 = vcmp.eq.f32.partialorder %v647, 0.0
        %v793 = vand.u32 %v647, 2147483648
        %v794 = vsel %vm792, %v793, %v791
        %v795 = vrsqrt.pop %v650
        %v796 = vmul.f32 %v795, %v650
        %v797 = vmul.f32 %v796, %v795
        %v798 = vmul.f32 0.5, %v797
        %v799 = vsub.f32 1.5, %v798
        %v800 = vmul.f32 %v795, %v799
        %v801 = vmul.f32 %v650, %v800
        %vm802 = vcmp.eq.f32.partialorder %v650, inf
        %v803 = vsel %vm802, %v650, %v801
        %vm804 = vcmp.eq.f32.partialorder %v650, 0.0
        %v805 = vand.u32 %v650, 2147483648
        %v806 = vsel %vm804, %v805, %v803
        %v807 = vrsqrt.pop %v653
        %v808 = vmul.f32 %v807, %v653
        %v809 = vmul.f32 %v808, %v807
        %v810 = vmul.f32 0.5, %v809
        %v811 = vsub.f32 1.5, %v810
        %v812 = vmul.f32 %v807, %v811
        %v813 = vmul.f32 %v653, %v812
        %vm814 = vcmp.eq.f32.partialorder %v653, inf
        %v815 = vsel %vm814, %v653, %v813
        %vm816 = vcmp.eq.f32.partialorder %v653, 0.0
        %v817 = vand.u32 %v653, 2147483648
        %v818 = vsel %vm816, %v817, %v815
        %v819 = vrsqrt.pop %v656
        %v820 = vmul.f32 %v819, %v656
        %v821 = vmul.f32 %v820, %v819
        %v822 = vmul.f32 0.5, %v821
        %v823 = vsub.f32 1.5, %v822
        %v824 = vmul.f32 %v819, %v823
        %v825 = vmul.f32 %v656, %v824
        %vm826 = vcmp.eq.f32.partialorder %v656, inf
        %v827 = vsel %vm826, %v656, %v825
        %vm828 = vcmp.eq.f32.partialorder %v656, 0.0
        %v829 = vand.u32 %v656, 2147483648
        %v830 = vsel %vm828, %v829, %v827
        %v831 = vrsqrt.pop %v659
        %v832 = vmul.f32 %v831, %v659
        %v833 = vmul.f32 %v832, %v831
        %v834 = vmul.f32 0.5, %v833
        %v835 = vsub.f32 1.5, %v834
        %v836 = vmul.f32 %v831, %v835
        %v837 = vmul.f32 %v659, %v836
        %vm838 = vcmp.eq.f32.partialorder %v659, inf
        %v839 = vsel %vm838, %v659, %v837
        %vm840 = vcmp.eq.f32.partialorder %v659, 0.0
        %v841 = vand.u32 %v659, 2147483648
        %v842 = vsel %vm840, %v841, %v839
        %v843 = vrsqrt.pop %v662
        %v844 = vmul.f32 %v843, %v662
        %v845 = vmul.f32 %v844, %v843
        %v846 = vmul.f32 0.5, %v845
        %v847 = vsub.f32 1.5, %v846
        %v848 = vmul.f32 %v843, %v847
        %v849 = vmul.f32 %v662, %v848
        %vm850 = vcmp.eq.f32.partialorder %v662, inf
        %v851 = vsel %vm850, %v662, %v849
        %vm852 = vcmp.eq.f32.partialorder %v662, 0.0
        %v853 = vand.u32 %v662, 2147483648
        %v854 = vsel %vm852, %v853, %v851
        %v855 = vsub.f32 0.0, %v674
        %v856 = vsub.f32 0.0, %v686
        %v857 = vsub.f32 0.0, %v698
        %v858 = vsub.f32 0.0, %v710
        %v859 = vsub.f32 0.0, %v722
        %v860 = vsub.f32 0.0, %v734
        %v861 = vsub.f32 0.0, %v746
        %v862 = vsub.f32 0.0, %v758
        %v863 = vsub.f32 0.0, %v770
        %v864 = vsub.f32 0.0, %v782
        %v865 = vsub.f32 0.0, %v794
        %v866 = vsub.f32 0.0, %v806
        %v867 = vsub.f32 0.0, %v818
        %v868 = vsub.f32 0.0, %v830
        %v869 = vsub.f32 0.0, %v842
        %v870 = vsub.f32 0.0, %v854
        %v887 = vlaneseq
        %v888 = vand.u32 %v887, 127
        %v889 = vperm.slane %v855, %v888
        %v890 = vadd.s32 %v888, 4294967288
        %v891 = vperm.slane %v856, %v890
        %vm892 = vcmask 130112
        %v893 = vsel %vm892, %v891, %v889
        %v894 = vadd.s32 %v888, 4294967280
        %v895 = vperm.slane %v857, %v894
        %vm896 = vcmask 195712
        %v897 = vsel %vm896, %v895, %v893
        %v898 = vadd.s32 %v888, 4294967272
        %v899 = vperm.slane %v858, %v898
        %vm900 = vcmask 261312
        %v901 = vsel %vm900, %v899, %v897
        %v902 = vadd.s32 %v888, 4294967264
        %v903 = vperm.slane %v859, %v902
        %vm904 = vcmask 326912
        %v905 = vsel %vm904, %v903, %v901
        %v906 = vadd.s32 %v888, 4294967256
        %v907 = vperm.slane %v860, %v906
        %vm908 = vcmask 392512
        %v909 = vsel %vm908, %v907, %v905
        %v910 = vadd.s32 %v888, 4294967248
        %v911 = vperm.slane %v861, %v910
        %vm912 = vcmask 458112
        %v913 = vsel %vm912, %v911, %v909
        %v914 = vadd.s32 %v888, 4294967240
        %v915 = vperm.slane %v862, %v914
        %vm916 = vcmask 523712
        %v917 = vsel %vm916, %v915, %v913
        %v918 = vadd.s32 %v888, 4294967232
        %v919 = vperm.slane %v863, %v918
        %vm920 = vcmask 589312
        %v921 = vsel %vm920, %v919, %v917
        %v922 = vadd.s32 %v888, 4294967224
        %v923 = vperm.slane %v864, %v922
        %vm924 = vcmask 654912
        %v925 = vsel %vm924, %v923, %v921
        %v926 = vadd.s32 %v888, 4294967216
        %v927 = vperm.slane %v865, %v926
        %vm928 = vcmask 720512
        %v929 = vsel %vm928, %v927, %v925
        %v930 = vadd.s32 %v888, 4294967208
        %v931 = vperm.slane %v866, %v930
        %vm932 = vcmask 786112
        %v933 = vsel %vm932, %v931, %v929
        %v934 = vadd.s32 %v888, 4294967200
        %v935 = vperm.slane %v867, %v934
        %vm936 = vcmask 851712
        %v937 = vsel %vm936, %v935, %v933
        %v938 = vadd.s32 %v888, 4294967192
        %v939 = vperm.slane %v868, %v938
        %vm940 = vcmask 917312
        %v941 = vsel %vm940, %v939, %v937
        %v942 = vadd.s32 %v888, 4294967184
        %v943 = vperm.slane %v869, %v942
        %vm944 = vcmask 982912
        %v945 = vsel %vm944, %v943, %v941
        %v946 = vadd.s32 %v888, 4294967176
        %v947 = vperm.slane %v870, %v946
        %vm948 = vcmask 1048512
        %v949 = vsel %vm948, %v947, %v945
        %951 = vst [vmem:[%s137] sm:$0x1] %v949
        %v952 = vadd.f32 %v520, 1e-06
        %v953 = vadd.f32 %v523, 1e-06
        %v954 = vadd.f32 %v526, 1e-06
        %v955 = vadd.f32 %v529, 1e-06
        %v956 = vadd.f32 %v532, 1e-06
        %v957 = vadd.f32 %v535, 1e-06
        %v958 = vadd.f32 %v538, 1e-06
        %v959 = vadd.f32 %v541, 1e-06
        %v960 = vadd.f32 %v544, 1e-06
        %v961 = vadd.f32 %v547, 1e-06
        %v962 = vadd.f32 %v550, 1e-06
        %v963 = vadd.f32 %v553, 1e-06
        %v964 = vadd.f32 %v556, 1e-06
        %v965 = vadd.f32 %v559, 1e-06
        %v966 = vadd.f32 %v562, 1e-06
        %v967 = vadd.f32 %v565, 1e-06
        %v968 = vmul.f32 %v952, %v952
        %v969 = vmul.f32 %v953, %v953
        %v970 = vmul.f32 %v954, %v954
        %v971 = vmul.f32 %v955, %v955
        %v972 = vmul.f32 %v956, %v956
        %v973 = vmul.f32 %v957, %v957
        %v974 = vmul.f32 %v958, %v958
        %v975 = vmul.f32 %v959, %v959
        %v976 = vmul.f32 %v960, %v960
        %v977 = vmul.f32 %v961, %v961
        %v978 = vmul.f32 %v962, %v962
        %v979 = vmul.f32 %v963, %v963
        %v980 = vmul.f32 %v964, %v964
        %v981 = vmul.f32 %v965, %v965
        %v982 = vmul.f32 %v966, %v966
        %v983 = vmul.f32 %v967, %v967
        %v984 = vsel %vm292, %v968, 0.0
        %985 = vadd.xlane.f32.xlu0 %v984
        %v986 = vpop.xlane.xlu0 %985
        %v987 = vsel %vm292, %v969, 0.0
        %988 = vadd.xlane.f32.xlu0 %v987
        %v989 = vpop.xlane.xlu0 %988
        %v990 = vsel %vm292, %v970, 0.0
        %991 = vadd.xlane.f32.xlu0 %v990
        %v992 = vpop.xlane.xlu0 %991
        %v993 = vsel %vm292, %v971, 0.0
        %994 = vadd.xlane.f32.xlu0 %v993
        %v995 = vpop.xlane.xlu0 %994
        %v996 = vsel %vm292, %v972, 0.0
        %997 = vadd.xlane.f32.xlu0 %v996
        %v998 = vpop.xlane.xlu0 %997
        %v999 = vsel %vm292, %v973, 0.0
        %1000 = vadd.xlane.f32.xlu0 %v999
        %v1001 = vpop.xlane.xlu0 %1000
        %v1002 = vsel %vm292, %v974, 0.0
        %1003 = vadd.xlane.f32.xlu0 %v1002
        %v1004 = vpop.xlane.xlu0 %1003
        %v1005 = vsel %vm292, %v975, 0.0
        %1006 = vadd.xlane.f32.xlu0 %v1005
        %v1007 = vpop.xlane.xlu0 %1006
        %v1008 = vsel %vm292, %v976, 0.0
        %1009 = vadd.xlane.f32.xlu0 %v1008
        %v1010 = vpop.xlane.xlu0 %1009
        %v1011 = vsel %vm292, %v977, 0.0
        %1012 = vadd.xlane.f32.xlu0 %v1011
        %v1013 = vpop.xlane.xlu0 %1012
        %v1014 = vsel %vm292, %v978, 0.0
        %1015 = vadd.xlane.f32.xlu0 %v1014
        %v1016 = vpop.xlane.xlu0 %1015
        %v1017 = vsel %vm292, %v979, 0.0
        %1018 = vadd.xlane.f32.xlu0 %v1017
        %v1019 = vpop.xlane.xlu0 %1018
        %v1020 = vsel %vm292, %v980, 0.0
        %1021 = vadd.xlane.f32.xlu0 %v1020
        %v1022 = vpop.xlane.xlu0 %1021
        %v1023 = vsel %vm292, %v981, 0.0
        %1024 = vadd.xlane.f32.xlu0 %v1023
        %v1025 = vpop.xlane.xlu0 %1024
        %v1026 = vsel %vm292, %v982, 0.0
        %1027 = vadd.xlane.f32.xlu0 %v1026
        %v1028 = vpop.xlane.xlu0 %1027
        %v1029 = vsel %vm292, %v983, 0.0
        %1030 = vadd.xlane.f32.xlu0 %v1029
        %v1031 = vpop.xlane.xlu0 %1030
        %v1032 = vrsqrt.pop %v986
        %v1033 = vmul.f32 %v1032, %v986
        %v1034 = vmul.f32 %v1033, %v1032
        %v1035 = vmul.f32 0.5, %v1034
        %v1036 = vsub.f32 1.5, %v1035
        %v1037 = vmul.f32 %v1032, %v1036
        %v1038 = vmul.f32 %v986, %v1037
        %vm1039 = vcmp.eq.f32.partialorder %v986, inf
        %v1040 = vsel %vm1039, %v986, %v1038
        %vm1041 = vcmp.eq.f32.partialorder %v986, 0.0
        %v1042 = vand.u32 %v986, 2147483648
        %v1043 = vsel %vm1041, %v1042, %v1040
        %v1044 = vrsqrt.pop %v989
        %v1045 = vmul.f32 %v1044, %v989
        %v1046 = vmul.f32 %v1045, %v1044
        %v1047 = vmul.f32 0.5, %v1046
        %v1048 = vsub.f32 1.5, %v1047
        %v1049 = vmul.f32 %v1044, %v1048
        %v1050 = vmul.f32 %v989, %v1049
        %vm1051 = vcmp.eq.f32.partialorder %v989, inf
        %v1052 = vsel %vm1051, %v989, %v1050
        %vm1053 = vcmp.eq.f32.partialorder %v989, 0.0
        %v1054 = vand.u32 %v989, 2147483648
        %v1055 = vsel %vm1053, %v1054, %v1052
        %v1056 = vrsqrt.pop %v992
        %v1057 = vmul.f32 %v1056, %v992
        %v1058 = vmul.f32 %v1057, %v1056
        %v1059 = vmul.f32 0.5, %v1058
        %v1060 = vsub.f32 1.5, %v1059
        %v1061 = vmul.f32 %v1056, %v1060
        %v1062 = vmul.f32 %v992, %v1061
        %vm1063 = vcmp.eq.f32.partialorder %v992, inf
        %v1064 = vsel %vm1063, %v992, %v1062
        %vm1065 = vcmp.eq.f32.partialorder %v992, 0.0
        %v1066 = vand.u32 %v992, 2147483648
        %v1067 = vsel %vm1065, %v1066, %v1064
        %v1068 = vrsqrt.pop %v995
        %v1069 = vmul.f32 %v1068, %v995
        %v1070 = vmul.f32 %v1069, %v1068
        %v1071 = vmul.f32 0.5, %v1070
        %v1072 = vsub.f32 1.5, %v1071
        %v1073 = vmul.f32 %v1068, %v1072
        %v1074 = vmul.f32 %v995, %v1073
        %vm1075 = vcmp.eq.f32.partialorder %v995, inf
        %v1076 = vsel %vm1075, %v995, %v1074
        %vm1077 = vcmp.eq.f32.partialorder %v995, 0.0
        %v1078 = vand.u32 %v995, 2147483648
        %v1079 = vsel %vm1077, %v1078, %v1076
        %v1080 = vrsqrt.pop %v998
        %v1081 = vmul.f32 %v1080, %v998
        %v1082 = vmul.f32 %v1081, %v1080
        %v1083 = vmul.f32 0.5, %v1082
        %v1084 = vsub.f32 1.5, %v1083
        %v1085 = vmul.f32 %v1080, %v1084
        %v1086 = vmul.f32 %v998, %v1085
        %vm1087 = vcmp.eq.f32.partialorder %v998, inf
        %v1088 = vsel %vm1087, %v998, %v1086
        %vm1089 = vcmp.eq.f32.partialorder %v998, 0.0
        %v1090 = vand.u32 %v998, 2147483648
        %v1091 = vsel %vm1089, %v1090, %v1088
        %v1092 = vrsqrt.pop %v1001
        %v1093 = vmul.f32 %v1092, %v1001
        %v1094 = vmul.f32 %v1093, %v1092
        %v1095 = vmul.f32 0.5, %v1094
        %v1096 = vsub.f32 1.5, %v1095
        %v1097 = vmul.f32 %v1092, %v1096
        %v1098 = vmul.f32 %v1001, %v1097
        %vm1099 = vcmp.eq.f32.partialorder %v1001, inf
        %v1100 = vsel %vm1099, %v1001, %v1098
        %vm1101 = vcmp.eq.f32.partialorder %v1001, 0.0
        %v1102 = vand.u32 %v1001, 2147483648
        %v1103 = vsel %vm1101, %v1102, %v1100
        %v1104 = vrsqrt.pop %v1004
        %v1105 = vmul.f32 %v1104, %v1004
        %v1106 = vmul.f32 %v1105, %v1104
        %v1107 = vmul.f32 0.5, %v1106
        %v1108 = vsub.f32 1.5, %v1107
        %v1109 = vmul.f32 %v1104, %v1108
        %v1110 = vmul.f32 %v1004, %v1109
        %vm1111 = vcmp.eq.f32.partialorder %v1004, inf
        %v1112 = vsel %vm1111, %v1004, %v1110
        %vm1113 = vcmp.eq.f32.partialorder %v1004, 0.0
        %v1114 = vand.u32 %v1004, 2147483648
        %v1115 = vsel %vm1113, %v1114, %v1112
        %v1116 = vrsqrt.pop %v1007
        %v1117 = vmul.f32 %v1116, %v1007
        %v1118 = vmul.f32 %v1117, %v1116
        %v1119 = vmul.f32 0.5, %v1118
        %v1120 = vsub.f32 1.5, %v1119
        %v1121 = vmul.f32 %v1116, %v1120
        %v1122 = vmul.f32 %v1007, %v1121
        %vm1123 = vcmp.eq.f32.partialorder %v1007, inf
        %v1124 = vsel %vm1123, %v1007, %v1122
        %vm1125 = vcmp.eq.f32.partialorder %v1007, 0.0
        %v1126 = vand.u32 %v1007, 2147483648
        %v1127 = vsel %vm1125, %v1126, %v1124
        %v1128 = vrsqrt.pop %v1010
        %v1129 = vmul.f32 %v1128, %v1010
        %v1130 = vmul.f32 %v1129, %v1128
        %v1131 = vmul.f32 0.5, %v1130
        %v1132 = vsub.f32 1.5, %v1131
        %v1133 = vmul.f32 %v1128, %v1132
        %v1134 = vmul.f32 %v1010, %v1133
        %vm1135 = vcmp.eq.f32.partialorder %v1010, inf
        %v1136 = vsel %vm1135, %v1010, %v1134
        %vm1137 = vcmp.eq.f32.partialorder %v1010, 0.0
        %v1138 = vand.u32 %v1010, 2147483648
        %v1139 = vsel %vm1137, %v1138, %v1136
        %v1140 = vrsqrt.pop %v1013
        %v1141 = vmul.f32 %v1140, %v1013
        %v1142 = vmul.f32 %v1141, %v1140
        %v1143 = vmul.f32 0.5, %v1142
        %v1144 = vsub.f32 1.5, %v1143
        %v1145 = vmul.f32 %v1140, %v1144
        %v1146 = vmul.f32 %v1013, %v1145
        %vm1147 = vcmp.eq.f32.partialorder %v1013, inf
        %v1148 = vsel %vm1147, %v1013, %v1146
        %vm1149 = vcmp.eq.f32.partialorder %v1013, 0.0
        %v1150 = vand.u32 %v1013, 2147483648
        %v1151 = vsel %vm1149, %v1150, %v1148
        %v1152 = vrsqrt.pop %v1016
        %v1153 = vmul.f32 %v1152, %v1016
        %v1154 = vmul.f32 %v1153, %v1152
        %v1155 = vmul.f32 0.5, %v1154
        %v1156 = vsub.f32 1.5, %v1155
        %v1157 = vmul.f32 %v1152, %v1156
        %v1158 = vmul.f32 %v1016, %v1157
        %vm1159 = vcmp.eq.f32.partialorder %v1016, inf
        %v1160 = vsel %vm1159, %v1016, %v1158
        %vm1161 = vcmp.eq.f32.partialorder %v1016, 0.0
        %v1162 = vand.u32 %v1016, 2147483648
        %v1163 = vsel %vm1161, %v1162, %v1160
        %v1164 = vrsqrt.pop %v1019
        %v1165 = vmul.f32 %v1164, %v1019
        %v1166 = vmul.f32 %v1165, %v1164
        %v1167 = vmul.f32 0.5, %v1166
        %v1168 = vsub.f32 1.5, %v1167
        %v1169 = vmul.f32 %v1164, %v1168
        %v1170 = vmul.f32 %v1019, %v1169
        %vm1171 = vcmp.eq.f32.partialorder %v1019, inf
        %v1172 = vsel %vm1171, %v1019, %v1170
        %vm1173 = vcmp.eq.f32.partialorder %v1019, 0.0
        %v1174 = vand.u32 %v1019, 2147483648
        %v1175 = vsel %vm1173, %v1174, %v1172
        %v1176 = vrsqrt.pop %v1022
        %v1177 = vmul.f32 %v1176, %v1022
        %v1178 = vmul.f32 %v1177, %v1176
        %v1179 = vmul.f32 0.5, %v1178
        %v1180 = vsub.f32 1.5, %v1179
        %v1181 = vmul.f32 %v1176, %v1180
        %v1182 = vmul.f32 %v1022, %v1181
        %vm1183 = vcmp.eq.f32.partialorder %v1022, inf
        %v1184 = vsel %vm1183, %v1022, %v1182
        %vm1185 = vcmp.eq.f32.partialorder %v1022, 0.0
        %v1186 = vand.u32 %v1022, 2147483648
        %v1187 = vsel %vm1185, %v1186, %v1184
        %v1188 = vrsqrt.pop %v1025
        %v1189 = vmul.f32 %v1188, %v1025
        %v1190 = vmul.f32 %v1189, %v1188
        %v1191 = vmul.f32 0.5, %v1190
        %v1192 = vsub.f32 1.5, %v1191
        %v1193 = vmul.f32 %v1188, %v1192
        %v1194 = vmul.f32 %v1025, %v1193
        %vm1195 = vcmp.eq.f32.partialorder %v1025, inf
        %v1196 = vsel %vm1195, %v1025, %v1194
        %vm1197 = vcmp.eq.f32.partialorder %v1025, 0.0
        %v1198 = vand.u32 %v1025, 2147483648
        %v1199 = vsel %vm1197, %v1198, %v1196
        %v1200 = vrsqrt.pop %v1028
        %v1201 = vmul.f32 %v1200, %v1028
        %v1202 = vmul.f32 %v1201, %v1200
        %v1203 = vmul.f32 0.5, %v1202
        %v1204 = vsub.f32 1.5, %v1203
        %v1205 = vmul.f32 %v1200, %v1204
        %v1206 = vmul.f32 %v1028, %v1205
        %vm1207 = vcmp.eq.f32.partialorder %v1028, inf
        %v1208 = vsel %vm1207, %v1028, %v1206
        %vm1209 = vcmp.eq.f32.partialorder %v1028, 0.0
        %v1210 = vand.u32 %v1028, 2147483648
        %v1211 = vsel %vm1209, %v1210, %v1208
        %v1212 = vrsqrt.pop %v1031
        %v1213 = vmul.f32 %v1212, %v1031
        %v1214 = vmul.f32 %v1213, %v1212
        %v1215 = vmul.f32 0.5, %v1214
        %v1216 = vsub.f32 1.5, %v1215
        %v1217 = vmul.f32 %v1212, %v1216
        %v1218 = vmul.f32 %v1031, %v1217
        %vm1219 = vcmp.eq.f32.partialorder %v1031, inf
        %v1220 = vsel %vm1219, %v1031, %v1218
        %vm1221 = vcmp.eq.f32.partialorder %v1031, 0.0
        %v1222 = vand.u32 %v1031, 2147483648
        %v1223 = vsel %vm1221, %v1222, %v1220
        %v1224 = vsub.f32 0.0, %v1043
        %v1225 = vsub.f32 0.0, %v1055
        %v1226 = vsub.f32 0.0, %v1067
        %v1227 = vsub.f32 0.0, %v1079
        %v1228 = vsub.f32 0.0, %v1091
        %v1229 = vsub.f32 0.0, %v1103
        %v1230 = vsub.f32 0.0, %v1115
        %v1231 = vsub.f32 0.0, %v1127
        %v1232 = vsub.f32 0.0, %v1139
        %v1233 = vsub.f32 0.0, %v1151
        %v1234 = vsub.f32 0.0, %v1163
        %v1235 = vsub.f32 0.0, %v1175
        %v1236 = vsub.f32 0.0, %v1187
        %v1237 = vsub.f32 0.0, %v1199
        %v1238 = vsub.f32 0.0, %v1211
        %v1239 = vsub.f32 0.0, %v1223
        %v1256 = vperm.slane %v1224, %v888
        %v1257 = vperm.slane %v1225, %v890
        %v1258 = vsel %vm892, %v1257, %v1256
        %v1259 = vperm.slane %v1226, %v894
        %v1260 = vsel %vm896, %v1259, %v1258
        %v1261 = vperm.slane %v1227, %v898
        %v1262 = vsel %vm900, %v1261, %v1260
        %v1263 = vperm.slane %v1228, %v902
        %v1264 = vsel %vm904, %v1263, %v1262
        %v1265 = vperm.slane %v1229, %v906
        %v1266 = vsel %vm908, %v1265, %v1264
        %v1267 = vperm.slane %v1230, %v910
        %v1268 = vsel %vm912, %v1267, %v1266
        %v1269 = vperm.slane %v1231, %v914
        %v1270 = vsel %vm916, %v1269, %v1268
        %v1271 = vperm.slane %v1232, %v918
        %v1272 = vsel %vm920, %v1271, %v1270
        %v1273 = vperm.slane %v1233, %v922
        %v1274 = vsel %vm924, %v1273, %v1272
        %v1275 = vperm.slane %v1234, %v926
        %v1276 = vsel %vm928, %v1275, %v1274
        %v1277 = vperm.slane %v1235, %v930
        %v1278 = vsel %vm932, %v1277, %v1276
        %v1279 = vperm.slane %v1236, %v934
        %v1280 = vsel %vm936, %v1279, %v1278
        %v1281 = vperm.slane %v1237, %v938
        %v1282 = vsel %vm940, %v1281, %v1280
        %v1283 = vperm.slane %v1238, %v942
        %v1284 = vsel %vm944, %v1283, %v1282
        %v1285 = vperm.slane %v1239, %v946
        %v1286 = vsel %vm948, %v1285, %v1284
        %1288 = vst [vmem:[%s137 + $0x1] sm:$0x1] %v1286
        %v1289 = vadd.f32 %v567, 1e-06
        %v1290 = vadd.f32 %v568, 1e-06
        %v1291 = vadd.f32 %v569, 1e-06
        %v1292 = vadd.f32 %v570, 1e-06
        %v1293 = vadd.f32 %v571, 1e-06
        %v1294 = vadd.f32 %v572, 1e-06
        %v1295 = vadd.f32 %v573, 1e-06
        %v1296 = vadd.f32 %v574, 1e-06
        %v1297 = vadd.f32 %v575, 1e-06
        %v1298 = vadd.f32 %v576, 1e-06
        %v1299 = vadd.f32 %v577, 1e-06
        %v1300 = vadd.f32 %v578, 1e-06
        %v1301 = vadd.f32 %v579, 1e-06
        %v1302 = vadd.f32 %v580, 1e-06
        %v1303 = vadd.f32 %v581, 1e-06
        %v1304 = vadd.f32 %v582, 1e-06
        %v1305 = vmul.f32 %v1289, %v1289
        %v1306 = vmul.f32 %v1290, %v1290
        %v1307 = vmul.f32 %v1291, %v1291
        %v1308 = vmul.f32 %v1292, %v1292
        %v1309 = vmul.f32 %v1293, %v1293
        %v1310 = vmul.f32 %v1294, %v1294
        %v1311 = vmul.f32 %v1295, %v1295
        %v1312 = vmul.f32 %v1296, %v1296
        %v1313 = vmul.f32 %v1297, %v1297
        %v1314 = vmul.f32 %v1298, %v1298
        %v1315 = vmul.f32 %v1299, %v1299
        %v1316 = vmul.f32 %v1300, %v1300
        %v1317 = vmul.f32 %v1301, %v1301
        %v1318 = vmul.f32 %v1302, %v1302
        %v1319 = vmul.f32 %v1303, %v1303
        %v1320 = vmul.f32 %v1304, %v1304
        %v1321 = vsel %vm292, %v1305, 0.0
        %1322 = vadd.xlane.f32.xlu0 %v1321
        %v1323 = vpop.xlane.xlu0 %1322
        %v1324 = vsel %vm292, %v1306, 0.0
        %1325 = vadd.xlane.f32.xlu0 %v1324
        %v1326 = vpop.xlane.xlu0 %1325
        %v1327 = vsel %vm292, %v1307, 0.0
        %1328 = vadd.xlane.f32.xlu0 %v1327
        %v1329 = vpop.xlane.xlu0 %1328
        %v1330 = vsel %vm292, %v1308, 0.0
        %1331 = vadd.xlane.f32.xlu0 %v1330
        %v1332 = vpop.xlane.xlu0 %1331
        %v1333 = vsel %vm292, %v1309, 0.0
        %1334 = vadd.xlane.f32.xlu0 %v1333
        %v1335 = vpop.xlane.xlu0 %1334
        %v1336 = vsel %vm292, %v1310, 0.0
        %1337 = vadd.xlane.f32.xlu0 %v1336
        %v1338 = vpop.xlane.xlu0 %1337
        %v1339 = vsel %vm292, %v1311, 0.0
        %1340 = vadd.xlane.f32.xlu0 %v1339
        %v1341 = vpop.xlane.xlu0 %1340
        %v1342 = vsel %vm292, %v1312, 0.0
        %1343 = vadd.xlane.f32.xlu0 %v1342
        %v1344 = vpop.xlane.xlu0 %1343
        %v1345 = vsel %vm292, %v1313, 0.0
        %1346 = vadd.xlane.f32.xlu0 %v1345
        %v1347 = vpop.xlane.xlu0 %1346
        %v1348 = vsel %vm292, %v1314, 0.0
        %1349 = vadd.xlane.f32.xlu0 %v1348
        %v1350 = vpop.xlane.xlu0 %1349
        %v1351 = vsel %vm292, %v1315, 0.0
        %1352 = vadd.xlane.f32.xlu0 %v1351
        %v1353 = vpop.xlane.xlu0 %1352
        %v1354 = vsel %vm292, %v1316, 0.0
        %1355 = vadd.xlane.f32.xlu0 %v1354
        %v1356 = vpop.xlane.xlu0 %1355
        %v1357 = vsel %vm292, %v1317, 0.0
        %1358 = vadd.xlane.f32.xlu0 %v1357
        %v1359 = vpop.xlane.xlu0 %1358
        %v1360 = vsel %vm292, %v1318, 0.0
        %1361 = vadd.xlane.f32.xlu0 %v1360
        %v1362 = vpop.xlane.xlu0 %1361
        %v1363 = vsel %vm292, %v1319, 0.0
        %1364 = vadd.xlane.f32.xlu0 %v1363
        %v1365 = vpop.xlane.xlu0 %1364
        %v1366 = vsel %vm292, %v1320, 0.0
        %1367 = vadd.xlane.f32.xlu0 %v1366
        %v1368 = vpop.xlane.xlu0 %1367
        %v1369 = vrsqrt.pop %v1323
        %v1370 = vmul.f32 %v1369, %v1323
        %v1371 = vmul.f32 %v1370, %v1369
        %v1372 = vmul.f32 0.5, %v1371
        %v1373 = vsub.f32 1.5, %v1372
        %v1374 = vmul.f32 %v1369, %v1373
        %v1375 = vmul.f32 %v1323, %v1374
        %vm1376 = vcmp.eq.f32.partialorder %v1323, inf
        %v1377 = vsel %vm1376, %v1323, %v1375
        %vm1378 = vcmp.eq.f32.partialorder %v1323, 0.0
        %v1379 = vand.u32 %v1323, 2147483648
        %v1380 = vsel %vm1378, %v1379, %v1377
        %v1381 = vrsqrt.pop %v1326
        %v1382 = vmul.f32 %v1381, %v1326
        %v1383 = vmul.f32 %v1382, %v1381
        %v1384 = vmul.f32 0.5, %v1383
        %v1385 = vsub.f32 1.5, %v1384
        %v1386 = vmul.f32 %v1381, %v1385
        %v1387 = vmul.f32 %v1326, %v1386
        %vm1388 = vcmp.eq.f32.partialorder %v1326, inf
        %v1389 = vsel %vm1388, %v1326, %v1387
        %vm1390 = vcmp.eq.f32.partialorder %v1326, 0.0
        %v1391 = vand.u32 %v1326, 2147483648
        %v1392 = vsel %vm1390, %v1391, %v1389
        %v1393 = vrsqrt.pop %v1329
        %v1394 = vmul.f32 %v1393, %v1329
        %v1395 = vmul.f32 %v1394, %v1393
        %v1396 = vmul.f32 0.5, %v1395
        %v1397 = vsub.f32 1.5, %v1396
        %v1398 = vmul.f32 %v1393, %v1397
        %v1399 = vmul.f32 %v1329, %v1398
        %vm1400 = vcmp.eq.f32.partialorder %v1329, inf
        %v1401 = vsel %vm1400, %v1329, %v1399
        %vm1402 = vcmp.eq.f32.partialorder %v1329, 0.0
        %v1403 = vand.u32 %v1329, 2147483648
        %v1404 = vsel %vm1402, %v1403, %v1401
        %v1405 = vrsqrt.pop %v1332
        %v1406 = vmul.f32 %v1405, %v1332
        %v1407 = vmul.f32 %v1406, %v1405
        %v1408 = vmul.f32 0.5, %v1407
        %v1409 = vsub.f32 1.5, %v1408
        %v1410 = vmul.f32 %v1405, %v1409
        %v1411 = vmul.f32 %v1332, %v1410
        %vm1412 = vcmp.eq.f32.partialorder %v1332, inf
        %v1413 = vsel %vm1412, %v1332, %v1411
        %vm1414 = vcmp.eq.f32.partialorder %v1332, 0.0
        %v1415 = vand.u32 %v1332, 2147483648
        %v1416 = vsel %vm1414, %v1415, %v1413
        %v1417 = vrsqrt.pop %v1335
        %v1418 = vmul.f32 %v1417, %v1335
        %v1419 = vmul.f32 %v1418, %v1417
        %v1420 = vmul.f32 0.5, %v1419
        %v1421 = vsub.f32 1.5, %v1420
        %v1422 = vmul.f32 %v1417, %v1421
        %v1423 = vmul.f32 %v1335, %v1422
        %vm1424 = vcmp.eq.f32.partialorder %v1335, inf
        %v1425 = vsel %vm1424, %v1335, %v1423
        %vm1426 = vcmp.eq.f32.partialorder %v1335, 0.0
        %v1427 = vand.u32 %v1335, 2147483648
        %v1428 = vsel %vm1426, %v1427, %v1425
        %v1429 = vrsqrt.pop %v1338
        %v1430 = vmul.f32 %v1429, %v1338
        %v1431 = vmul.f32 %v1430, %v1429
        %v1432 = vmul.f32 0.5, %v1431
        %v1433 = vsub.f32 1.5, %v1432
        %v1434 = vmul.f32 %v1429, %v1433
        %v1435 = vmul.f32 %v1338, %v1434
        %vm1436 = vcmp.eq.f32.partialorder %v1338, inf
        %v1437 = vsel %vm1436, %v1338, %v1435
        %vm1438 = vcmp.eq.f32.partialorder %v1338, 0.0
        %v1439 = vand.u32 %v1338, 2147483648
        %v1440 = vsel %vm1438, %v1439, %v1437
        %v1441 = vrsqrt.pop %v1341
        %v1442 = vmul.f32 %v1441, %v1341
        %v1443 = vmul.f32 %v1442, %v1441
        %v1444 = vmul.f32 0.5, %v1443
        %v1445 = vsub.f32 1.5, %v1444
        %v1446 = vmul.f32 %v1441, %v1445
        %v1447 = vmul.f32 %v1341, %v1446
        %vm1448 = vcmp.eq.f32.partialorder %v1341, inf
        %v1449 = vsel %vm1448, %v1341, %v1447
        %vm1450 = vcmp.eq.f32.partialorder %v1341, 0.0
        %v1451 = vand.u32 %v1341, 2147483648
        %v1452 = vsel %vm1450, %v1451, %v1449
        %v1453 = vrsqrt.pop %v1344
        %v1454 = vmul.f32 %v1453, %v1344
        %v1455 = vmul.f32 %v1454, %v1453
        %v1456 = vmul.f32 0.5, %v1455
        %v1457 = vsub.f32 1.5, %v1456
        %v1458 = vmul.f32 %v1453, %v1457
        %v1459 = vmul.f32 %v1344, %v1458
        %vm1460 = vcmp.eq.f32.partialorder %v1344, inf
        %v1461 = vsel %vm1460, %v1344, %v1459
        %vm1462 = vcmp.eq.f32.partialorder %v1344, 0.0
        %v1463 = vand.u32 %v1344, 2147483648
        %v1464 = vsel %vm1462, %v1463, %v1461
        %v1465 = vrsqrt.pop %v1347
        %v1466 = vmul.f32 %v1465, %v1347
        %v1467 = vmul.f32 %v1466, %v1465
        %v1468 = vmul.f32 0.5, %v1467
        %v1469 = vsub.f32 1.5, %v1468
        %v1470 = vmul.f32 %v1465, %v1469
        %v1471 = vmul.f32 %v1347, %v1470
        %vm1472 = vcmp.eq.f32.partialorder %v1347, inf
        %v1473 = vsel %vm1472, %v1347, %v1471
        %vm1474 = vcmp.eq.f32.partialorder %v1347, 0.0
        %v1475 = vand.u32 %v1347, 2147483648
        %v1476 = vsel %vm1474, %v1475, %v1473
        %v1477 = vrsqrt.pop %v1350
        %v1478 = vmul.f32 %v1477, %v1350
        %v1479 = vmul.f32 %v1478, %v1477
        %v1480 = vmul.f32 0.5, %v1479
        %v1481 = vsub.f32 1.5, %v1480
        %v1482 = vmul.f32 %v1477, %v1481
        %v1483 = vmul.f32 %v1350, %v1482
        %vm1484 = vcmp.eq.f32.partialorder %v1350, inf
        %v1485 = vsel %vm1484, %v1350, %v1483
        %vm1486 = vcmp.eq.f32.partialorder %v1350, 0.0
        %v1487 = vand.u32 %v1350, 2147483648
        %v1488 = vsel %vm1486, %v1487, %v1485
        %v1489 = vrsqrt.pop %v1353
        %v1490 = vmul.f32 %v1489, %v1353
        %v1491 = vmul.f32 %v1490, %v1489
        %v1492 = vmul.f32 0.5, %v1491
        %v1493 = vsub.f32 1.5, %v1492
        %v1494 = vmul.f32 %v1489, %v1493
        %v1495 = vmul.f32 %v1353, %v1494
        %vm1496 = vcmp.eq.f32.partialorder %v1353, inf
        %v1497 = vsel %vm1496, %v1353, %v1495
        %vm1498 = vcmp.eq.f32.partialorder %v1353, 0.0
        %v1499 = vand.u32 %v1353, 2147483648
        %v1500 = vsel %vm1498, %v1499, %v1497
        %v1501 = vrsqrt.pop %v1356
        %v1502 = vmul.f32 %v1501, %v1356
        %v1503 = vmul.f32 %v1502, %v1501
        %v1504 = vmul.f32 0.5, %v1503
        %v1505 = vsub.f32 1.5, %v1504
        %v1506 = vmul.f32 %v1501, %v1505
        %v1507 = vmul.f32 %v1356, %v1506
        %vm1508 = vcmp.eq.f32.partialorder %v1356, inf
        %v1509 = vsel %vm1508, %v1356, %v1507
        %vm1510 = vcmp.eq.f32.partialorder %v1356, 0.0
        %v1511 = vand.u32 %v1356, 2147483648
        %v1512 = vsel %vm1510, %v1511, %v1509
        %v1513 = vrsqrt.pop %v1359
        %v1514 = vmul.f32 %v1513, %v1359
        %v1515 = vmul.f32 %v1514, %v1513
        %v1516 = vmul.f32 0.5, %v1515
        %v1517 = vsub.f32 1.5, %v1516
        %v1518 = vmul.f32 %v1513, %v1517
        %v1519 = vmul.f32 %v1359, %v1518
        %vm1520 = vcmp.eq.f32.partialorder %v1359, inf
        %v1521 = vsel %vm1520, %v1359, %v1519
        %vm1522 = vcmp.eq.f32.partialorder %v1359, 0.0
        %v1523 = vand.u32 %v1359, 2147483648
        %v1524 = vsel %vm1522, %v1523, %v1521
        %v1525 = vrsqrt.pop %v1362
        %v1526 = vmul.f32 %v1525, %v1362
        %v1527 = vmul.f32 %v1526, %v1525
        %v1528 = vmul.f32 0.5, %v1527
        %v1529 = vsub.f32 1.5, %v1528
        %v1530 = vmul.f32 %v1525, %v1529
        %v1531 = vmul.f32 %v1362, %v1530
        %vm1532 = vcmp.eq.f32.partialorder %v1362, inf
        %v1533 = vsel %vm1532, %v1362, %v1531
        %vm1534 = vcmp.eq.f32.partialorder %v1362, 0.0
        %v1535 = vand.u32 %v1362, 2147483648
        %v1536 = vsel %vm1534, %v1535, %v1533
        %v1537 = vrsqrt.pop %v1365
        %v1538 = vmul.f32 %v1537, %v1365
        %v1539 = vmul.f32 %v1538, %v1537
        %v1540 = vmul.f32 0.5, %v1539
        %v1541 = vsub.f32 1.5, %v1540
        %v1542 = vmul.f32 %v1537, %v1541
        %v1543 = vmul.f32 %v1365, %v1542
        %vm1544 = vcmp.eq.f32.partialorder %v1365, inf
        %v1545 = vsel %vm1544, %v1365, %v1543
        %vm1546 = vcmp.eq.f32.partialorder %v1365, 0.0
        %v1547 = vand.u32 %v1365, 2147483648
        %v1548 = vsel %vm1546, %v1547, %v1545
        %v1549 = vrsqrt.pop %v1368
        %v1550 = vmul.f32 %v1549, %v1368
        %v1551 = vmul.f32 %v1550, %v1549
        %v1552 = vmul.f32 0.5, %v1551
        %v1553 = vsub.f32 1.5, %v1552
        %v1554 = vmul.f32 %v1549, %v1553
        %v1555 = vmul.f32 %v1368, %v1554
        %vm1556 = vcmp.eq.f32.partialorder %v1368, inf
        %v1557 = vsel %vm1556, %v1368, %v1555
        %vm1558 = vcmp.eq.f32.partialorder %v1368, 0.0
        %v1559 = vand.u32 %v1368, 2147483648
        %v1560 = vsel %vm1558, %v1559, %v1557
        %v1561 = vsub.f32 0.0, %v1380
        %v1562 = vsub.f32 0.0, %v1392
        %v1563 = vsub.f32 0.0, %v1404
        %v1564 = vsub.f32 0.0, %v1416
        %v1565 = vsub.f32 0.0, %v1428
        %v1566 = vsub.f32 0.0, %v1440
        %v1567 = vsub.f32 0.0, %v1452
        %v1568 = vsub.f32 0.0, %v1464
        %v1569 = vsub.f32 0.0, %v1476
        %v1570 = vsub.f32 0.0, %v1488
        %v1571 = vsub.f32 0.0, %v1500
        %v1572 = vsub.f32 0.0, %v1512
        %v1573 = vsub.f32 0.0, %v1524
        %v1574 = vsub.f32 0.0, %v1536
        %v1575 = vsub.f32 0.0, %v1548
        %v1576 = vsub.f32 0.0, %v1560
        %v1593 = vperm.slane %v1561, %v888
        %v1594 = vperm.slane %v1562, %v890
        %v1595 = vsel %vm892, %v1594, %v1593
        %v1596 = vperm.slane %v1563, %v894
        %v1597 = vsel %vm896, %v1596, %v1595
        %v1598 = vperm.slane %v1564, %v898
        %v1599 = vsel %vm900, %v1598, %v1597
        %v1600 = vperm.slane %v1565, %v902
        %v1601 = vsel %vm904, %v1600, %v1599
        %v1602 = vperm.slane %v1566, %v906
        %v1603 = vsel %vm908, %v1602, %v1601
        %v1604 = vperm.slane %v1567, %v910
        %v1605 = vsel %vm912, %v1604, %v1603
        %v1606 = vperm.slane %v1568, %v914
        %v1607 = vsel %vm916, %v1606, %v1605
        %v1608 = vperm.slane %v1569, %v918
        %v1609 = vsel %vm920, %v1608, %v1607
        %v1610 = vperm.slane %v1570, %v922
        %v1611 = vsel %vm924, %v1610, %v1609
        %v1612 = vperm.slane %v1571, %v926
        %v1613 = vsel %vm928, %v1612, %v1611
        %v1614 = vperm.slane %v1572, %v930
        %v1615 = vsel %vm932, %v1614, %v1613
        %v1616 = vperm.slane %v1573, %v934
        %v1617 = vsel %vm936, %v1616, %v1615
        %v1618 = vperm.slane %v1574, %v938
        %v1619 = vsel %vm940, %v1618, %v1617
        %v1620 = vperm.slane %v1575, %v942
        %v1621 = vsel %vm944, %v1620, %v1619
        %v1622 = vperm.slane %v1576, %v946
        %v1623 = vsel %vm948, %v1622, %v1621
        %1625 = vst [vmem:[%s137 + $0x2] sm:$0x1] %v1623
        %s1626 = sand.u32 %s71, 1
        %s1627 = scalar_lea.sflag [#allocation3], %s1626
        %s1628 = sand.u32 %s71, 1
        %s1629 = smul.addr %s1628, 4
        %s1630 = scalar_lea.vmem [#allocation2], %s1629
        // Predicated region
        $region29: #{tpu_custom_call.1} parent=27 // pred_check
          %p1631 = pneg %p81
        $region30: #{tpu_custom_call.1} parent=27 // pred_check_branch
          %1633 = sbr.rel (%p1631) target = $region32
        $region31: #{tpu_custom_call.1} parent=27 // pred_region
          %1635 = vsyncadd %s1627, 0
          %s1636 = smul.addr %s16, 4
          %s1637 = scalar_lea.hbm %s2, %s1636
          %s1639 = sshll.u32 %s1630, 4
          %s1640 = int_to_ptr.vmem [resolvable:$true] %s1639
          %s1641 = sshll.u32 %s1637, 4
          %s1642 = int_to_ptr.hbm [resolvable:$true] %s1641
          %1644 = dma.vmem_to_hbm [thread:$0]  %s1640, 64, %s1642, %s1627
        $region32: #{tpu_custom_call.1} parent=27 // pred_fallthru
          _
      $region28: #{tpu_custom_call.1} parent=5 // pred_fallthru
        _
      %p1645 = scmp.le.s32.totalorder 2, %s11
      // Predicated region
      $region33: #{tpu_custom_call.1} parent=5 // pred_check
        %p1646 = pneg %p1645
      $region34: #{tpu_custom_call.1} parent=5 // pred_check_branch
        %1648 = sbr.rel (%p1646) target = $region36
      $region35: #{tpu_custom_call.1} parent=5 // pred_region
        %s1649 = ssub.s32 %s11, 2
        // Predicated region
        $region37: #{tpu_custom_call.1} parent=35 // pred_check
          %p1650 = pneg %p87
        $region38: #{tpu_custom_call.1} parent=35 // pred_check_branch
          %1652 = sbr.rel (%p1650) target = $region40
        $region39: #{tpu_custom_call.1} parent=35 // pred_region
          %s1653 = sand.u32 %s72, 1
          %s1654 = scalar_lea.sflag [#allocation3], %s1653
          %s1655 = sand.u32 %s72, 1
          %s1656 = smul.addr %s1655, 4
          %s1657 = scalar_lea.vmem [#allocation2], %s1656
          %1659 = dma.done %s1654, 64
        $region40: #{tpu_custom_call.1} parent=35 // pred_fallthru
          _
      $region36: #{tpu_custom_call.1} parent=5 // pred_fallthru
        _
    $region6: #{tpu_custom_call.1} parent=1 // loop_footer
      %s15 = sadd.s32 1, %s11
    $region7: #{tpu_custom_call.1} parent=1 // loop_footer_branch
      %10 = sbr.rel target = $region3
    $region8: #{tpu_custom_call.1} parent=1 // loop_exit
      _
    %1660 = vsyncpa [#allocation3], 1
    %s1661 = scalar_lea.sflag [#allocation3], 1
    %1662 = vsyncpa %s1661, 1

</llo_original>
